<compile_context>
chip_gen: v6e
topology: v6e:2x2x1
jax: 0.10.0
libtpu: 0.0.40
codegen_flags: <defaults>
</compile_context>

<pallas_src>
import functools

import jax
import jax.numpy as jnp
from jax.experimental import pallas as pl
from jax.experimental.pallas import tpu as pltpu


# --------------------------- per-generation sizing --------------------------

_MiB = 1024 * 1024


def _tpu_vmem_capacity():
    try:
        info = pltpu.get_tpu_info()
        cap = getattr(info, "vmem_capacity_bytes", None)
        if cap:
            return int(cap)
    except Exception:
        pass
    return 64 * _MiB  # conservative (v7x) fallback


_VMEM_CAP = _tpu_vmem_capacity()
_VMEM_LIMIT_BYTES = max(32 * _MiB, min(_VMEM_CAP - 16 * _MiB, 96 * _MiB))
if _VMEM_CAP >= 96 * _MiB:          # v5e / v6e: 128 MiB physical VMEM
    _TM_TARGET, _TN_TARGET = 2048, 1024
else:                               # v7x: 64 MiB physical VMEM
    _TM_TARGET, _TN_TARGET = 1024, 512


def _cparams(semantics):
    return pltpu.CompilerParams(dimension_semantics=semantics,
                                vmem_limit_bytes=_VMEM_LIMIT_BYTES)


def _pick_tile(dim, target, aligns):
    """Largest multiple of one of `aligns` dividing `dim`, <= target; else full
    dim (satisfies the (8,128) / full-dim block constraint)."""
    if dim <= target:
        return dim
    for align in aligns:
        t = (target // align) * align
        while t >= align:
            if dim % t == 0:
                return t
            t -= align
    return dim


# ------------------------------ Pallas kernels ------------------------------

def _linear_kernel(x_ref, w_ref, b_ref, o_ref, *, activation):
    # Full-K single-shot matmul: no accumulator scratch, no k revisits.
    y = jnp.dot(x_ref[...], w_ref[...], preferred_element_type=jnp.float32)
    y = y + b_ref[...].astype(jnp.float32)
    if activation == "gelu":
        y = jax.nn.gelu(y, approximate=False)  # exact, matches torch GELU
    o_ref[...] = y.astype(o_ref.dtype)


def linear(x2d, w, b, activation=None, out_dtype=jnp.bfloat16):
    """y = act(x2d @ w + b); x2d: [N, Din] bf16, w: [Din, Dout] bf16, b f32."""
    N, Din = x2d.shape
    Dout = w.shape[1]
    TM = _pick_tile(N, _TM_TARGET, (16, 8))
    TN = _pick_tile(Dout, _TN_TARGET, (256, 128))
    grid = (N // TM, Dout // TN)
    return pl.pallas_call(
        functools.partial(_linear_kernel, activation=activation),
        out_shape=jax.ShapeDtypeStruct((N, Dout), out_dtype),
        grid=grid,
        in_specs=[pl.BlockSpec((TM, Din), lambda i, j: (i, 0)),
                  pl.BlockSpec((Din, TN), lambda i, j: (0, j)),
                  pl.BlockSpec((1, TN), lambda i, j: (0, j))],
        out_specs=pl.BlockSpec((TM, TN), lambda i, j: (i, j)),
        compiler_params=_cparams(("parallel", "parallel")),
    )(x2d, w, b)


def _linear_res_ln_kernel(x_ref, w_ref, b_ref, r_ref, g_ref, be_ref, o_ref,
                          *, eps):
    y = jnp.dot(x_ref[...], w_ref[...], preferred_element_type=jnp.float32)
    y = (y + b_ref[...].astype(jnp.float32) + r_ref[...].astype(jnp.float32))
    mu = jnp.mean(y, axis=-1, keepdims=True)
    yc = y - mu
    var = jnp.mean(yc * yc, axis=-1, keepdims=True)
    y = yc * jax.lax.rsqrt(var + eps)
    o_ref[...] = (y * g_ref[...] + be_ref[...]).astype(o_ref.dtype)


def linear_residual_layernorm(x2d, w, b, res2d, gamma, beta, eps=1e-12,
                              out_dtype=jnp.bfloat16):
    """LayerNorm((x2d @ w + b) + res2d); full-K, full-H per step."""
    N, Din = x2d.shape
    H = w.shape[1]
    TM = _pick_tile(N, _TM_TARGET, (16, 8))
    grid = (N // TM,)
    return pl.pallas_call(
        functools.partial(_linear_res_ln_kernel, eps=eps),
        out_shape=jax.ShapeDtypeStruct((N, H), out_dtype),
        grid=grid,
        in_specs=[pl.BlockSpec((TM, Din), lambda i: (i, 0)),
                  pl.BlockSpec((Din, H), lambda i: (0, 0)),
                  pl.BlockSpec((1, H), lambda i: (0, 0)),
                  pl.BlockSpec((TM, H), lambda i: (i, 0)),
                  pl.BlockSpec((1, H), lambda i: (0, 0)),
                  pl.BlockSpec((1, H), lambda i: (0, 0))],
        out_specs=pl.BlockSpec((TM, H), lambda i: (i, 0)),
        compiler_params=_cparams(("parallel",)),
    )(x2d, w, b, res2d, gamma, beta)


def _layernorm_kernel(x_ref, g_ref, b_ref, o_ref, *, eps):
    x = x_ref[...].astype(jnp.float32)
    mu = jnp.mean(x, axis=-1, keepdims=True)
    xc = x - mu
    var = jnp.mean(xc * xc, axis=-1, keepdims=True)
    y = xc * jax.lax.rsqrt(var + eps)
    o_ref[...] = (y * g_ref[...] + b_ref[...]).astype(o_ref.dtype)


def layernorm(x2d, gamma, beta, eps=1e-12, out_dtype=jnp.bfloat16):
    """LayerNorm(x2d) — no residual (embedding LN); bf16 in, upcast per tile."""
    N, H = x2d.shape
    TM = _pick_tile(N, _TM_TARGET, (16, 8))
    return pl.pallas_call(
        functools.partial(_layernorm_kernel, eps=eps),
        out_shape=jax.ShapeDtypeStruct((N, H), out_dtype),
        grid=(N // TM,),
        in_specs=[pl.BlockSpec((TM, H), lambda i: (i, 0)),
                  pl.BlockSpec((1, H), lambda i: (0, 0)),
                  pl.BlockSpec((1, H), lambda i: (0, 0))],
        out_specs=pl.BlockSpec((TM, H), lambda i: (i, 0)),
        compiler_params=_cparams(("parallel",)),
    )(x2d, gamma, beta)


def _qkv_kernel(x_ref, w_ref, b_ref, o_ref):
    # One (TM, H) x (H, dh) matmul per (row-tile, q/k/v-head) grid step.
    y = jnp.dot(x_ref[...], w_ref[0], preferred_element_type=jnp.float32)
    o_ref[0] = (y + b_ref[0].astype(jnp.float32)).astype(o_ref.dtype)


def qkv_proj(x2d, w3, b3, out_dtype=jnp.bfloat16):
    """Fused QKV projection emitting a head-major layout.

    x2d: [N, H] bf16; w3: [3*nH, H, dh] bf16 (per-head columns, Q pre-scaled
    by 1/sqrt(dh)); b3: [3*nH, 1, dh] f32.  Output: [3*nH, N, dh] bf16.
    """
    N, H = x2d.shape
    n_slices, _, dh = w3.shape
    TM = _pick_tile(N, _TM_TARGET, (16, 8))
    grid = (N // TM, n_slices)
    return pl.pallas_call(
        _qkv_kernel,
        out_shape=jax.ShapeDtypeStruct((n_slices, N, dh), out_dtype),
        grid=grid,
        in_specs=[pl.BlockSpec((TM, H), lambda i, j: (i, 0)),
                  pl.BlockSpec((1, H, dh), lambda i, j: (j, 0, 0)),
                  pl.BlockSpec((1, 1, dh), lambda i, j: (j, 0, 0))],
        out_specs=pl.BlockSpec((1, TM, dh), lambda i, j: (j, i, 0)),
        compiler_params=_cparams(("parallel", "parallel")),
    )(x2d, w3, b3)


def _attn_kernel(qkv_ref, m_ref, o_ref, *, heads_per_block, d_head):
    # qkv_ref: (3, g, 1, S, dh) — head-major; q/k/v loads are whole tiles,
    # no lane slicing.  Scale 1/sqrt(dh) is already folded into the Q weights.
    m = m_ref[0]                                   # (1, S) additive mask (f32)
    outs = []
    for hh in range(heads_per_block):              # small static unroll (<= 2 real)
        q = qkv_ref[0, hh, 0]                      # (S, dh) bf16
        k = qkv_ref[1, hh, 0]
        v = qkv_ref[2, hh, 0]
        # Contract last dims directly — no k.T / XLU transpose.
        s = jax.lax.dot_general(q, k, (((1,), (1,)), ((), ())),
                                preferred_element_type=jnp.float32) + m
        s = s - jnp.max(s, axis=-1, keepdims=True)
        p = jnp.exp(s)
        p = p * pl.reciprocal(jnp.sum(p, axis=-1, keepdims=True), approx=True)
        outs.append(jnp.dot(p.astype(v.dtype), v,
                            preferred_element_type=jnp.float32))
    o = outs[0] if len(outs) == 1 else jnp.concatenate(outs, axis=-1)
    o_ref[0] = o.astype(o_ref.dtype)               # single lane-dense store


def _heads_per_block(n_heads, d_head):
    """Smallest head group whose merged width is 128-lane aligned (or full H)."""
    for g in range(1, n_heads):
        if n_heads % g == 0 and (g * d_head) % 128 == 0:
            return g
    return n_heads


def attention(qkv, add_mask, n_heads):
    """qkv: [3*nH, B*S, dh] head-major; add_mask: [B, 1, S] (0 / -1e9) f32."""
    three_nh, N, dh = qkv.shape
    B = add_mask.shape[0]
    S = N // B
    g = _heads_per_block(n_heads, dh)
    qkv5 = qkv.reshape(3, n_heads, B, S, dh)       # free reshape
    return pl.pallas_call(
        functools.partial(_attn_kernel, heads_per_block=g, d_head=dh),
        out_shape=jax.ShapeDtypeStruct((B, S, n_heads * dh), jnp.bfloat16),
        grid=(B, n_heads // g),
        in_specs=[pl.BlockSpec((3, g, 1, S, dh), lambda b, hb: (0, hb, b, 0, 0)),
                  pl.BlockSpec((1, 1, S), lambda b, hb: (b, 0, 0))],
        out_specs=pl.BlockSpec((1, S, g * dh), lambda b, hb: (b, 0, hb)),
        compiler_params=_cparams(("parallel", "parallel")),
    )(qkv5, add_mask)


# ------------------------------ model (glue) --------------------------------

def init_params(key, vocab=100, max_pos=16, hidden=32, n_heads=4,
                ffn=128, n_layers=2):
    std = 0.02
    d_head = hidden // n_heads
    keys = iter(jax.random.split(key, 4 + 8 * n_layers))

    def nrm(shape, dtype=jnp.float32):
        return (std * jax.random.normal(next(keys), shape, jnp.float32)
                ).astype(dtype)

    params = {
        "n_heads": n_heads,
        # bf16 embeddings: embedding-LN input needs no wrapper-side cast.
        "word_emb": nrm((vocab, hidden), jnp.bfloat16),
        "pos_emb": nrm((max_pos, hidden), jnp.bfloat16),
        "emb_ln_g": jnp.ones((1, hidden), jnp.float32),
        "emb_ln_b": jnp.zeros((1, hidden), jnp.float32),
        "layers": [],
        "reg_w": nrm((hidden, 1), jnp.float32),   # tiny head stays in XLA/f32
        "reg_b": jnp.zeros((1,), jnp.float32),
    }

    scale = 1.0 / (d_head ** 0.5)

    def _heads(w):  # (H, H) -> (nH, H, dh): per-head column slices, head-major
        return jnp.transpose(w.reshape(hidden, n_heads, d_head), (1, 0, 2))

    for _ in range(n_layers):
        # Fold the attention scale into the Q weights offline (bias is zero;
        # scale it too when converting real checkpoints).
        wq = nrm((hidden, hidden)) * scale
        wk = nrm((hidden, hidden))
        wv = nrm((hidden, hidden))
        w_qkv = jnp.concatenate([_heads(wq), _heads(wk), _heads(wv)], axis=0)
        params["layers"].append({
            "w_qkv": w_qkv.astype(jnp.bfloat16),              # [3*nH, H, dh]
            "b_qkv": jnp.zeros((3 * n_heads, 1, d_head), jnp.float32),
            "wo": nrm((hidden, hidden), jnp.bfloat16),
            "bo": jnp.zeros((1, hidden), jnp.float32),
            "sa_ln_g": jnp.ones((1, hidden), jnp.float32),
            "sa_ln_b": jnp.zeros((1, hidden), jnp.float32),
            "w1": nrm((hidden, ffn), jnp.bfloat16),
            "b1": jnp.zeros((1, ffn), jnp.float32),
            "w2": nrm((ffn, hidden), jnp.bfloat16),
            "b2": jnp.zeros((1, hidden), jnp.float32),
            "out_ln_g": jnp.ones((1, hidden), jnp.float32),
            "out_ln_b": jnp.zeros((1, hidden), jnp.float32),
        })
    return params


def distilbert_regressor_forward(params, input_ids, attention_mask):
    B, S = input_ids.shape
    H = params["word_emb"].shape[1]
    nH = params["n_heads"]

    # embeddings (gather is plain-JAX glue, bf16) + embedding LayerNorm (Pallas)
    pos = jnp.arange(S)
    x = params["word_emb"][input_ids] + params["pos_emb"][pos][None, :, :]
    x2d = layernorm(x.reshape(B * S, H),
                    params["emb_ln_g"], params["emb_ln_b"])      # bf16 [B*S,H]

    add_mask = ((1.0 - attention_mask.astype(jnp.float32)) * -1e9)[:, None, :]

    for layer in params["layers"]:
        # fused, head-major QKV projection  -> [3*nH, B*S, dh]
        qkv = qkv_proj(x2d, layer["w_qkv"], layer["b_qkv"])
        # multi-head self-attention, grid over (batch, head blocks) -> [B,S,H]
        ctx = attention(qkv, add_mask, nH)
        # output projection + residual + LayerNorm fused in one kernel
        x2d = linear_residual_layernorm(ctx.reshape(B * S, H),
                                        layer["wo"], layer["bo"], x2d,
                                        layer["sa_ln_g"], layer["sa_ln_b"])
        # feed-forward: GELU fused into first matmul, residual+LN into second
        h = linear(x2d, layer["w1"], layer["b1"], activation="gelu")
        x2d = linear_residual_layernorm(h, layer["w2"], layer["b2"], x2d,
                                        layer["out_ln_g"], layer["out_ln_b"])

    hidden = x2d.reshape(B, S, H)
    # TODO(synk): HF DistilBertModel returns only last_hidden_state by default;
    # `outputs[1]` is interpreted here as the pooled [CLS]-token hidden state.
    cls = hidden[:, 0, :].astype(jnp.float32)
    # regressor = Dropout (identity at inference) + Linear(H -> 1).
    # A 1-lane Pallas output would be all masked stores + launch overhead, so
    # this micro-matmul runs in plain XLA (per perf review).
    return cls @ params["reg_w"] + params["reg_b"]


# ---------------------------------- main -------------------------------------

if __name__ == "__main__":
    key = jax.random.PRNGKey(0)
    k_par, k_ids = jax.random.split(key)

    B, S = 2, 8
    VOCAB, MAX_POS, HIDDEN, N_HEADS, FFN, N_LAYERS = 100, 16, 32, 4, 128, 2

    params = init_params(k_par, vocab=VOCAB, max_pos=MAX_POS, hidden=HIDDEN,
                         n_heads=N_HEADS, ffn=FFN, n_layers=N_LAYERS)

    input_ids = jax.random.randint(k_ids, (B, S), 0, VOCAB, dtype=jnp.int32)
    attention_mask = jnp.array([[1, 1, 1, 1, 1, 1, 1, 1],
                                [1, 1, 1, 1, 1, 0, 0, 0]], dtype=jnp.int32)

    out = distilbert_regressor_forward(params, input_ids, attention_mask)
    out = jax.block_until_ready(out)
    assert out.shape == (B, 1) and out.dtype == jnp.float32
    print("KERNEL_OK")
</pallas_src>

<mosaic_0001>
module attributes {stable_mosaic.version = 11 : i64} {
  func.func @_layernorm_kernel(%arg0: i32, %arg1: memref<16x32xbf16, #tpu.memory_space<vmem>>, %arg2: memref<1x32xf32, #tpu.memory_space<vmem>>, %arg3: memref<1x32xf32, #tpu.memory_space<vmem>>, %arg4: memref<16x32xbf16, #tpu.memory_space<vmem>>) attributes {dimension_semantics = [#tpu.dimension_semantics<parallel>], iteration_bounds = array<i64: 1>, scalar_prefetch = 0 : i64, scratch_operands = 0 : i64, tpu.core_type = #tpu.core_type<tc>, window_params = [{transform_indices = @transform_0, window_bounds = array<i64: 16, 32>}, {pipeline_mode = #tpu.pipeline_mode<synchronous>, transform_indices = @transform_1, window_bounds = array<i64: 1, 32>}, {pipeline_mode = #tpu.pipeline_mode<synchronous>, transform_indices = @transform_2, window_bounds = array<i64: 1, 32>}, {transform_indices = @transform_3, window_bounds = array<i64: 16, 32>}]} {
    %c0 = arith.constant 0 : index
    %c0_0 = arith.constant 0 : index
    %0 = vector.load %arg1[%c0, %c0_0] : memref<16x32xbf16, #tpu.memory_space<vmem>>, vector<16x32xbf16>
    %1 = arith.extf %0 : vector<16x32xbf16> to vector<16x32xf32>
    %cst = arith.constant dense<0.000000e+00> : vector<16xf32>
    %2 = vector.multi_reduction <add>, %1, %cst [1] : vector<16x32xf32> to vector<16xf32>
    %3 = vector.shape_cast %2 : vector<16xf32> to vector<16x1xf32>
    %cst_1 = arith.constant 3.200000e+01 : f32
    %4 = vector.broadcast %cst_1 : f32 to vector<16x1xf32>
    %5 = arith.divf %3, %4 : vector<16x1xf32>
    %6 = vector.broadcast %5 : vector<16x1xf32> to vector<16x32xf32>
    %7 = arith.subf %1, %6 : vector<16x32xf32>
    %8 = arith.mulf %7, %7 : vector<16x32xf32>
    %cst_2 = arith.constant dense<0.000000e+00> : vector<16xf32>
    %9 = vector.multi_reduction <add>, %8, %cst_2 [1] : vector<16x32xf32> to vector<16xf32>
    %10 = vector.shape_cast %9 : vector<16xf32> to vector<16x1xf32>
    %cst_3 = arith.constant 3.200000e+01 : f32
    %11 = vector.broadcast %cst_3 : f32 to vector<16x1xf32>
    %12 = arith.divf %10, %11 : vector<16x1xf32>
    %cst_4 = arith.constant 9.99999996E-13 : f32
    %13 = vector.broadcast %cst_4 : f32 to vector<16x1xf32>
    %14 = arith.addf %12, %13 : vector<16x1xf32>
    %15 = math.rsqrt %14 : vector<16x1xf32>
    %16 = vector.broadcast %15 : vector<16x1xf32> to vector<16x32xf32>
    %17 = arith.mulf %7, %16 : vector<16x32xf32>
    %c0_5 = arith.constant 0 : index
    %c0_6 = arith.constant 0 : index
    %18 = vector.load %arg2[%c0_5, %c0_6] : memref<1x32xf32, #tpu.memory_space<vmem>>, vector<1x32xf32>
    %19 = vector.broadcast %18 : vector<1x32xf32> to vector<16x32xf32>
    %20 = arith.mulf %17, %19 : vector<16x32xf32>
    %c0_7 = arith.constant 0 : index
    %c0_8 = arith.constant 0 : index
    %21 = vector.load %arg3[%c0_7, %c0_8] : memref<1x32xf32, #tpu.memory_space<vmem>>, vector<1x32xf32>
    %22 = vector.broadcast %21 : vector<1x32xf32> to vector<16x32xf32>
    %23 = arith.addf %20, %22 : vector<16x32xf32>
    %24 = arith.truncf %23 : vector<16x32xf32> to vector<16x32xbf16>
    %c0_9 = arith.constant 0 : index
    %c0_10 = arith.constant 0 : index
    %25 = vector.load %arg4[%c0_9, %c0_10] : memref<16x32xbf16, #tpu.memory_space<vmem>>, vector<16x32xbf16>
    tpu.vector_store %arg4[%c0_9, %c0_10], %24 {strides = array<i32>} : memref<16x32xbf16, #tpu.memory_space<vmem>>, vector<16x32xbf16>,
    return
  }
  func.func @transform_0(%arg0: i32) -> (i32, i32) {
    %c0_i32 = arith.constant 0 : i32
    %c0_i32_0 = arith.constant 0 : i32
    return %arg0, %c0_i32 : i32, i32
  }
  func.func @transform_1(%arg0: i32) -> (i32, i32) {
    %c0_i32 = arith.constant 0 : i32
    %c0_i32_0 = arith.constant 0 : i32
    %c0_i32_1 = arith.constant 0 : i32
    return %c0_i32, %c0_i32_0 : i32, i32
  }
  func.func @transform_2(%arg0: i32) -> (i32, i32) {
    %c0_i32 = arith.constant 0 : i32
    %c0_i32_0 = arith.constant 0 : i32
    %c0_i32_1 = arith.constant 0 : i32
    return %c0_i32, %c0_i32_0 : i32, i32
  }
  func.func @transform_3(%arg0: i32) -> (i32, i32) {
    %c0_i32 = arith.constant 0 : i32
    %c0_i32_0 = arith.constant 0 : i32
    return %arg0, %c0_i32 : i32, i32
  }
}

</mosaic_0001>

<llo_original>
// kernel: tpu_custom_call.1
$region0: #{tpu_custom_call.1}
  #allocation0 [shape = 'u32[]', space=smem, size = 0x4, offset = 0x4, fixed_abs, tag = 'smem constant byte address 0x4 - core index']
  #allocation1 [shape = 'u32[144,128]{1,0:T(1,128)}', space=vmem, size = 0x12000, scoped, tag = 'internal scratch']
  %s0 = inlined_call_operand.hbm [shape: bf16[16,32], index: 0, kind: input, shape index: {}]
  %s1 = inlined_call_operand.vmem [shape: f32[1,32], index: 1, kind: input, shape index: {}]
  %s2 = inlined_call_operand.vmem [shape: f32[1,32], index: 2, kind: input, shape index: {}]
  %s3 = inlined_call_operand.hbm [shape: bf16[16,32], index: 3, kind: output, shape index: {}]
  %s4 = sld [smem:[#allocation0]]
  $region26: #{tpu_custom_call.1} parent=0
    _
  %s6 = ssub.s32 1, %s4
  %s7 = scalar_select 0, %s6, %s4
  $region1: #{tpu_custom_call.1} parent=0
    #allocation2 [shape = 'u8[4096]{0}', space=vmem, size = 0x1000, scoped, tag = 'input window, operand 0, single buffered']
    #allocation3 [shape = 's32[1]{0}', space=sflag, size = 0x4, scoped, tag = 'scoped memory for tpu_custom_call.1']
    #allocation4 [shape = 's32[1]{0}', space=sflag, size = 0x4, scoped, tag = 'scoped memory for tpu_custom_call.1']
    #allocation5 [shape = 'u8[4096]{0}', space=vmem, size = 0x1000, scoped, tag = 'output window, operand 0, single buffered']
    %8 = vsyncpa [#allocation3], 0
    %9 = vsyncpa [#allocation4], 0
    // Predicated region
    $region2: #{tpu_custom_call.1} parent=1 // pred_check
      _
    $region3: #{tpu_custom_call.1} parent=1 // pred_check_branch
      %11 = sbr.rel (0) target = $region5
    $region4: #{tpu_custom_call.1} parent=1 // pred_region
      %s13 = ssub.s32 128, 128
      %14 = vsyncadd [#allocation3], %s13
      %s15 = sshll.u32 [#allocation2], 4
      %s16 = int_to_ptr.vmem [resolvable:$true] %s15
      %21 = dma.hbm_to_vmem [thread:$0]  %s0, 128, %s16, [#allocation3], 64, 64, 4
    $region5: #{tpu_custom_call.1} parent=1 // pred_fallthru
      _
    // Predicated region
    $region6: #{tpu_custom_call.1} parent=1 // pred_check
      _
    $region7: #{tpu_custom_call.1} parent=1 // pred_check_branch
      %23 = sbr.rel (0) target = $region9
    $region8: #{tpu_custom_call.1} parent=1 // pred_region
      _
    $region9: #{tpu_custom_call.1} parent=1 // pred_fallthru
      _
    // Predicated region
    $region10: #{tpu_custom_call.1} parent=1 // pred_check
      _
    $region11: #{tpu_custom_call.1} parent=1 // pred_check_branch
      %25 = sbr.rel (0) target = $region13
    $region12: #{tpu_custom_call.1} parent=1 // pred_region
      _
    $region13: #{tpu_custom_call.1} parent=1 // pred_fallthru
      _
    // Predicated region
    $region14: #{tpu_custom_call.1} parent=1 // pred_check
      _
    $region15: #{tpu_custom_call.1} parent=1 // pred_check_branch
      %27 = sbr.rel (0) target = $region17
    $region16: #{tpu_custom_call.1} parent=1 // pred_region
      %28 = dma.done [#allocation3], 128
    $region17: #{tpu_custom_call.1} parent=1 // pred_fallthru
      _
    %v29 = vld [vmem:[#allocation2] sm:$0xf]
    %v30 = vld [vmem:[#allocation2 + $0x4] sm:$0xf]
    %v31 = vunpack.c.l.bf16 %v29
    %v32 = vunpack.c.l.bf16 %v30
    %vm33 = vcmask 261120
    %v34 = vsel %vm33, %v31, 0.0
    %35 = vadd.xlane.f32.xlu0 %v34
    %v36 = vpop.xlane.xlu0 %35
    %v37 = vsel %vm33, %v32, 0.0
    %38 = vadd.xlane.f32.xlu0 %v37
    %v39 = vpop.xlane.xlu0 %38
    %v40 = vrcp.pop 32.0
    %v41 = vmul.f32 %v36, %v40
    %v42 = vmul.f32 %v39, %v40
    %v43 = vsub.f32 %v31, %v41
    %v44 = vsub.f32 %v32, %v42
    %v45 = vmul.f32 %v43, %v43
    %v46 = vmul.f32 %v44, %v44
    %v47 = vsel %vm33, %v45, 0.0
    %48 = vadd.xlane.f32.xlu0 %v47
    %v49 = vpop.xlane.xlu0 %48
    %v50 = vsel %vm33, %v46, 0.0
    %51 = vadd.xlane.f32.xlu0 %v50
    %v52 = vpop.xlane.xlu0 %51
    %v53 = vmul.f32 %v49, %v40
    %v54 = vmul.f32 %v52, %v40
    %v55 = vadd.f32 %v53, 1e-12
    %v56 = vadd.f32 %v54, 1e-12
    %v57 = vrsqrt.pop %v55
    %v58 = vrsqrt.pop %v56
    %v59 = vmul.f32 %v43, %v57
    %v60 = vmul.f32 %v44, %v58
    %v61 = vld [vmem:[%s1] sm:$0x1]
    %v63 = vlaneseq
    %v64 = vshrl.u32 %v63, 7
    %v65 = vsub.s32 0, %v64
    %v66 = vrot.slane %v61, %v65
    %v68 = vmul.f32 %v59, %v66
    %v69 = vmul.f32 %v60, %v66
    %v70 = vld [vmem:[%s2] sm:$0x1]
    %v72 = vlaneseq
    %v73 = vshrl.u32 %v72, 7
    %v74 = vsub.s32 0, %v73
    %v75 = vrot.slane %v70, %v74
    %v77 = vadd.f32 %v68, %v75
    %v78 = vadd.f32 %v69, %v75
    %v79 = vpack.c.bf16 %v78, %v77
    %v81 = vunpack.c.l.b16 %v79
    %v82 = vunpack.c.h.b16 %v79
    %v83 = vpack.c.b16 %v81, %v81
    %v84 = vpack.c.b16 %v82, %v82
    %vm87 = vcmask 257024
    %88 = vst.msk [vmem:[#allocation5] sm:$0xf] %vm87, %v83
    %89 = vst.msk [vmem:[#allocation5 + $0x4] sm:$0xf] %vm87, %v84
    // Predicated region
    $region18: #{tpu_custom_call.1} parent=1 // pred_check
      _
    $region19: #{tpu_custom_call.1} parent=1 // pred_check_branch
      %91 = sbr.rel (0) target = $region21
    $region20: #{tpu_custom_call.1} parent=1 // pred_region
      %s93 = ssub.s32 128, 128
      %94 = vsyncadd [#allocation4], %s93
      %s95 = sshll.u32 [#allocation5], 4
      %s96 = int_to_ptr.vmem [resolvable:$true] %s95
      %101 = dma.vmem_to_hbm [thread:$0]  %s96, 128, %s3, [#allocation4], 64, 64, 4
    $region21: #{tpu_custom_call.1} parent=1 // pred_fallthru
      _
    // Predicated region
    $region22: #{tpu_custom_call.1} parent=1 // pred_check
      _
    $region23: #{tpu_custom_call.1} parent=1 // pred_check_branch
      %103 = sbr.rel (0) target = $region25
    $region24: #{tpu_custom_call.1} parent=1 // pred_region
      %104 = dma.done [#allocation4], 128
    $region25: #{tpu_custom_call.1} parent=1 // pred_fallthru
      _
    %105 = vsyncpa [#allocation3], 1
    %106 = vsyncpa [#allocation4], 1

</llo_original>
